<compile_context>
chip_gen: v7x
topology: tpu7x:2x2x1
jax: 0.10.0
libtpu: 0.0.40
codegen_flags: <defaults>
</compile_context>

<pallas_src>
import jax
import jax.numpy as jnp
from jax.experimental import pallas as pl
from jax.experimental.pallas import tpu as pltpu


# If in_features is at most this, do the first layer on the VPU as broadcast
# FMAs instead of an MXU matmul (MountainCar has in_features=2).
_VPU_FMA_MAX_K = 8

# Cached result of "does this JAX accept pipeline_mode=pl.Buffered(1)?".
_SINGLE_BUFFER_WEIGHTS_OK = None


def rel_kernel(x_ref, w1_ref, b1_ref, w2_ref, b2_ref, o_ref):
    # x_ref : (TB, F) f32     w1_ref : (F, H) f32    b1_ref : (1, H) f32
    # w2_ref: (H, A_pad) bf16 b2_ref : (1, A_pad) f32 o_ref : (TB, A_pad) f32
    F = x_ref.shape[1]

    if F <= _VPU_FMA_MAX_K:
        # First linear on the VPU: bias + sum_k x[:, k] * w1[k, :]
        # (static Python loop over a tiny, fixed F; stays f32 for v5e).
        h = jnp.broadcast_to(b1_ref[...], (x_ref.shape[0], b1_ref.shape[1]))
        for k in range(F):
            h = h + x_ref[:, k:k + 1] * w1_ref[k:k + 1, :]
    else:
        # Fallback for larger input widths: regular MXU matmul.
        h = jnp.dot(x_ref[...], w1_ref[...],
                    preferred_element_type=jnp.float32) + b1_ref[...]

    # ReLU.
    h = jnp.maximum(h, 0.0)

    # Second linear on the MXU: bf16 x bf16 inputs, f32 accumulate.
    out = jnp.dot(h.astype(w2_ref.dtype), w2_ref[...],
                  preferred_element_type=jnp.float32)
    out = out + b2_ref[...]
    o_ref[...] = out.astype(o_ref.dtype)


def _round_up(n, m):
    return ((n + m - 1) // m) * m


def _build_rel_call(B_pad, TB, F, H, A_pad, cost, single_buffer_weights):
    """Construct the pallas_call callable for one (B_pad, TB) configuration."""
    if single_buffer_weights:
        w_kwargs = dict(pipeline_mode=pl.Buffered(buffer_count=1))
    else:
        w_kwargs = {}

    in_specs = [
        pl.BlockSpec((TB, F), lambda i: (i, 0)),                 # x tile / step
        pl.BlockSpec((F, H), lambda i: (0, 0), **w_kwargs),      # w1 resident
        pl.BlockSpec((1, H), lambda i: (0, 0), **w_kwargs),      # b1 resident
        pl.BlockSpec((H, A_pad), lambda i: (0, 0), **w_kwargs),  # w2 (bf16) resident
        pl.BlockSpec((1, A_pad), lambda i: (0, 0), **w_kwargs),  # b2 resident
    ]
    return pl.pallas_call(
        rel_kernel,
        out_shape=jax.ShapeDtypeStruct((B_pad, A_pad), jnp.float32),
        grid=(B_pad // TB,),
        in_specs=in_specs,
        out_specs=pl.BlockSpec((TB, A_pad), lambda i: (i, 0)),
        compiler_params=pltpu.CompilerParams(
            dimension_semantics=("parallel",)),
        cost_estimate=cost,
    )


def rel_forward(x, w1, b1, w2, b2, *, block_b=2048):
    """x: (B, in_features) f32 -> (B, n_actions) f32.

    Pads the action dimension to a multiple of 8 lanes, stores w2 as bf16,
    and grids over the batch so the same kernel serves both tiny rollout
    batches and large replay-buffer batches.
    """
    global _SINGLE_BUFFER_WEIGHTS_OK

    B, F = x.shape
    H = w1.shape[1]
    A = w2.shape[1]
    A_pad = _round_up(max(A, 8), 8)   # narrow padded output: block dim == array dim

    # Second layer: bf16 weights (zero columns past the real actions), f32 bias.
    w2p = jnp.zeros((H, A_pad), jnp.bfloat16).at[:, :A].set(w2.astype(jnp.bfloat16))
    b2p = jnp.zeros((1, A_pad), jnp.float32).at[:, :A].set(b2.astype(jnp.float32))

    # Batch tiling: multiple of 8 sublanes, capped at block_b, and capped at
    # ceil(B/2) so the "parallel" grid axis spans both v7x TensorCores whenever
    # the batch allows it (only one extra ~0.35us step on single-TC chips).
    TB = min(block_b, _round_up(max(-(-B // 2), 1), 8))
    B_pad = _round_up(B, TB)
    if B_pad != B:
        x = jnp.pad(x, ((0, B_pad - B), (0, 0)))

    f32 = jnp.dtype(jnp.float32).itemsize
    bf16 = jnp.dtype(jnp.bfloat16).itemsize
    cost = pl.CostEstimate(
        flops=2 * B_pad * H * (F + A_pad),
        transcendentals=0,
        bytes_accessed=int(x.size * f32 + w1.size * f32 + b1.size * f32
                           + w2p.size * bf16 + b2p.size * f32
                           + B_pad * A_pad * f32),
    )

    args = (x, w1, b1, w2p, b2p)
    out = None
    if _SINGLE_BUFFER_WEIGHTS_OK is not False:
        try:
            out = _build_rel_call(B_pad, TB, F, H, A_pad, cost, True)(*args)
            _SINGLE_BUFFER_WEIGHTS_OK = True
        except Exception:
            # This JAX build rejects pipeline_mode on top-level BlockSpecs;
            # fall back to default (double-buffered) weight specs.
            _SINGLE_BUFFER_WEIGHTS_OK = False
    if out is None:
        out = _build_rel_call(B_pad, TB, F, H, A_pad, cost, False)(*args)

    # Drop batch padding and the padded (fake) action columns.
    return out[:B, :A]


def init_params(key, in_features, hidden, n_actions):
    """Deterministic init mimicking PyTorch nn.Linear default (uniform +-1/sqrt(fan_in))."""
    k1, k2, k3, k4 = jax.random.split(key, 4)
    lim1 = 1.0 / jnp.sqrt(jnp.float32(in_features))
    lim2 = 1.0 / jnp.sqrt(jnp.float32(hidden))
    # Stored as (in, out) = transpose of PyTorch's (out, in) weight.
    w1 = jax.random.uniform(k1, (in_features, hidden), jnp.float32, -lim1, lim1)
    b1 = jax.random.uniform(k2, (1, hidden), jnp.float32, -lim1, lim1)
    w2 = jax.random.uniform(k3, (hidden, n_actions), jnp.float32, -lim2, lim2)
    b2 = jax.random.uniform(k4, (1, n_actions), jnp.float32, -lim2, lim2)
    return w1, b1, w2, b2


if __name__ == "__main__":
    key = jax.random.PRNGKey(0)
    kx, kp = jax.random.split(key)

    # MountainCar-ish shapes: state dim 2, 3 actions, small rollout batch.
    batch, in_features, hidden, n_actions = 8, 2, 256, 3

    x = jax.random.normal(kx, (batch, in_features), jnp.float32)
    w1, b1, w2, b2 = init_params(kp, in_features, hidden, n_actions)

    out = jax.block_until_ready(rel_forward(x, w1, b1, w2, b2))

    # Pure-JAX reference (f32).  bf16 second-layer inputs -> loosened tolerance.
    ref = jnp.maximum(x @ w1 + b1, 0.0) @ w2 + b2
    assert out.shape == (batch, n_actions)
    assert jnp.allclose(out, ref, atol=2e-2, rtol=2e-2)

    # Larger, non-multiple-of-tile batch (replay-buffer path; grid has 2 steps).
    xb = jax.random.normal(kx, (1000, in_features), jnp.float32)
    outb = jax.block_until_ready(rel_forward(xb, w1, b1, w2, b2))
    refb = jnp.maximum(xb @ w1 + b1, 0.0) @ w2 + b2
    assert outb.shape == (1000, n_actions)
    assert jnp.allclose(outb, refb, atol=2e-2, rtol=2e-2)

    print("KERNEL_OK")
</pallas_src>

<mosaic_0001>
module attributes {stable_mosaic.version = 11 : i64} {
  func.func @rel_kernel(%arg0: i32, %arg1: memref<8x2xf32, #tpu.memory_space<vmem>>, %arg2: memref<2x256xf32, #tpu.memory_space<vmem>>, %arg3: memref<1x256xf32, #tpu.memory_space<vmem>>, %arg4: memref<256x8xbf16, #tpu.memory_space<vmem>>, %arg5: memref<1x8xf32, #tpu.memory_space<vmem>>, %arg6: memref<8x8xf32, #tpu.memory_space<vmem>>) attributes {dimension_semantics = [#tpu.dimension_semantics<parallel>], iteration_bounds = array<i64: 1>, scalar_prefetch = 0 : i64, scratch_operands = 0 : i64, tpu.core_type = #tpu.core_type<tc>, window_params = [{transform_indices = @transform_0, window_bounds = array<i64: 8, 2>}, {pipeline_mode = #tpu.pipeline_mode<synchronous>, transform_indices = @transform_1, window_bounds = array<i64: 2, 256>}, {pipeline_mode = #tpu.pipeline_mode<synchronous>, transform_indices = @transform_2, window_bounds = array<i64: 1, 256>}, {pipeline_mode = #tpu.pipeline_mode<synchronous>, transform_indices = @transform_3, window_bounds = array<i64: 256, 8>}, {pipeline_mode = #tpu.pipeline_mode<synchronous>, transform_indices = @transform_4, window_bounds = array<i64: 1, 8>}, {transform_indices = @transform_5, window_bounds = array<i64: 8, 8>}]} {
    %c0 = arith.constant 0 : index
    %c0_0 = arith.constant 0 : index
    %0 = vector.load %arg3[%c0, %c0_0] : memref<1x256xf32, #tpu.memory_space<vmem>>, vector<1x256xf32>
    %1 = vector.shape_cast %0 : vector<1x256xf32> to vector<1x256xf32>
    %2 = vector.broadcast %1 : vector<1x256xf32> to vector<8x256xf32>
    %c0_1 = arith.constant 0 : index
    %c0_2 = arith.constant 0 : index
    %3 = vector.load %arg1[%c0_1, %c0_2] : memref<8x2xf32, #tpu.memory_space<vmem>>, vector<8x1xf32>
    %c0_3 = arith.constant 0 : index
    %c0_4 = arith.constant 0 : index
    %4 = vector.load %arg2[%c0_3, %c0_4] : memref<2x256xf32, #tpu.memory_space<vmem>>, vector<1x256xf32>
    %5 = vector.broadcast %3 : vector<8x1xf32> to vector<8x256xf32>
    %6 = vector.broadcast %4 : vector<1x256xf32> to vector<8x256xf32>
    %7 = arith.mulf %5, %6 : vector<8x256xf32>
    %8 = arith.addf %2, %7 : vector<8x256xf32>
    %c0_5 = arith.constant 0 : index
    %c1 = arith.constant 1 : index
    %9 = vector.load %arg1[%c0_5, %c1] : memref<8x2xf32, #tpu.memory_space<vmem>>, vector<8x1xf32>
    %c1_6 = arith.constant 1 : index
    %c0_7 = arith.constant 0 : index
    %10 = vector.load %arg2[%c1_6, %c0_7] : memref<2x256xf32, #tpu.memory_space<vmem>>, vector<1x256xf32>
    %11 = vector.broadcast %9 : vector<8x1xf32> to vector<8x256xf32>
    %12 = vector.broadcast %10 : vector<1x256xf32> to vector<8x256xf32>
    %13 = arith.mulf %11, %12 : vector<8x256xf32>
    %14 = arith.addf %8, %13 : vector<8x256xf32>
    %cst = arith.constant 0.000000e+00 : f32
    %15 = vector.broadcast %cst : f32 to vector<8x256xf32>
    %16 = arith.maximumf %14, %15 : vector<8x256xf32>
    %17 = arith.truncf %16 : vector<8x256xf32> to vector<8x256xbf16>
    %c0_8 = arith.constant 0 : index
    %c0_9 = arith.constant 0 : index
    %18 = vector.load %arg4[%c0_8, %c0_9] : memref<256x8xbf16, #tpu.memory_space<vmem>>, vector<256x8xbf16>
    %cst_10 = arith.constant dense<0.000000e+00> : vector<8x8xf32>
    %19 = tpu.matmul %17, %18, %cst_10 {dimension_numbers = #tpu.dot_dimension_numbers<[1], [0], [0], [1], [0, 0, 1, 1], [], []>} : vector<8x256xbf16>, vector<256x8xbf16>, vector<8x8xf32> -> vector<8x8xf32>
    %c0_11 = arith.constant 0 : index
    %c0_12 = arith.constant 0 : index
    %20 = vector.load %arg5[%c0_11, %c0_12] : memref<1x8xf32, #tpu.memory_space<vmem>>, vector<1x8xf32>
    %21 = vector.broadcast %20 : vector<1x8xf32> to vector<8x8xf32>
    %22 = arith.addf %19, %21 : vector<8x8xf32>
    %c0_13 = arith.constant 0 : index
    %c0_14 = arith.constant 0 : index
    %23 = vector.load %arg6[%c0_13, %c0_14] : memref<8x8xf32, #tpu.memory_space<vmem>>, vector<8x8xf32>
    tpu.vector_store %arg6[%c0_13, %c0_14], %22 {strides = array<i32>} : memref<8x8xf32, #tpu.memory_space<vmem>>, vector<8x8xf32>,
    return
  }
  func.func @transform_0(%arg0: i32) -> (i32, i32) {
    %c0_i32 = arith.constant 0 : i32
    %c0_i32_0 = arith.constant 0 : i32
    return %arg0, %c0_i32 : i32, i32
  }
  func.func @transform_1(%arg0: i32) -> (i32, i32) {
    %c0_i32 = arith.constant 0 : i32
    %c0_i32_0 = arith.constant 0 : i32
    %c0_i32_1 = arith.constant 0 : i32
    return %c0_i32, %c0_i32_0 : i32, i32
  }
  func.func @transform_2(%arg0: i32) -> (i32, i32) {
    %c0_i32 = arith.constant 0 : i32
    %c0_i32_0 = arith.constant 0 : i32
    %c0_i32_1 = arith.constant 0 : i32
    return %c0_i32, %c0_i32_0 : i32, i32
  }
  func.func @transform_3(%arg0: i32) -> (i32, i32) {
    %c0_i32 = arith.constant 0 : i32
    %c0_i32_0 = arith.constant 0 : i32
    %c0_i32_1 = arith.constant 0 : i32
    return %c0_i32, %c0_i32_0 : i32, i32
  }
  func.func @transform_4(%arg0: i32) -> (i32, i32) {
    %c0_i32 = arith.constant 0 : i32
    %c0_i32_0 = arith.constant 0 : i32
    %c0_i32_1 = arith.constant 0 : i32
    return %c0_i32, %c0_i32_0 : i32, i32
  }
  func.func @transform_5(%arg0: i32) -> (i32, i32) {
    %c0_i32 = arith.constant 0 : i32
    %c0_i32_0 = arith.constant 0 : i32
    return %arg0, %c0_i32 : i32, i32
  }
}

module attributes {stable_mosaic.version = 11 : i64} {
  func.func @rel_kernel(%arg0: i32, %arg1: memref<8x2xf32, #tpu.memory_space<vmem>>, %arg2: memref<2x256xf32, #tpu.memory_space<vmem>>, %arg3: memref<1x256xf32, #tpu.memory_space<vmem>>, %arg4: memref<256x8xbf16, #tpu.memory_space<vmem>>, %arg5: memref<1x8xf32, #tpu.memory_space<vmem>>, %arg6: memref<8x8xf32, #tpu.memory_space<vmem>>) attributes {dimension_semantics = [#tpu.dimension_semantics<parallel>], iteration_bounds = array<i64: 1>, scalar_prefetch = 0 : i64, scratch_operands = 0 : i64, tpu.core_type = #tpu.core_type<tc>, window_params = [{transform_indices = @transform_0, window_bounds = array<i64: 8, 2>}, {pipeline_mode = #tpu.pipeline_mode<synchronous>, transform_indices = @transform_1, window_bounds = array<i64: 2, 256>}, {pipeline_mode = #tpu.pipeline_mode<synchronous>, transform_indices = @transform_2, window_bounds = array<i64: 1, 256>}, {pipeline_mode = #tpu.pipeline_mode<synchronous>, transform_indices = @transform_3, window_bounds = array<i64: 256, 8>}, {pipeline_mode = #tpu.pipeline_mode<synchronous>, transform_indices = @transform_4, window_bounds = array<i64: 1, 8>}, {transform_indices = @transform_5, window_bounds = array<i64: 8, 8>}]} {
    %c0 = arith.constant 0 : index
    %c0_0 = arith.constant 0 : index
    %0 = vector.load %arg3[%c0, %c0_0] : memref<1x256xf32, #tpu.memory_space<vmem>>, vector<1x256xf32>
    %1 = vector.shape_cast %0 : vector<1x256xf32> to vector<1x256xf32>
    %2 = vector.broadcast %1 : vector<1x256xf32> to vector<8x256xf32>
    %c0_1 = arith.constant 0 : index
    %c0_2 = arith.constant 0 : index
    %3 = vector.load %arg1[%c0_1, %c0_2] : memref<8x2xf32, #tpu.memory_space<vmem>>, vector<8x1xf32>
    %c0_3 = arith.constant 0 : index
    %c0_4 = arith.constant 0 : index
    %4 = vector.load %arg2[%c0_3, %c0_4] : memref<2x256xf32, #tpu.memory_space<vmem>>, vector<1x256xf32>
    %5 = vector.broadcast %3 : vector<8x1xf32> to vector<8x256xf32>
    %6 = vector.broadcast %4 : vector<1x256xf32> to vector<8x256xf32>
    %7 = arith.mulf %5, %6 : vector<8x256xf32>
    %8 = arith.addf %2, %7 : vector<8x256xf32>
    %c0_5 = arith.constant 0 : index
    %c1 = arith.constant 1 : index
    %9 = vector.load %arg1[%c0_5, %c1] : memref<8x2xf32, #tpu.memory_space<vmem>>, vector<8x1xf32>
    %c1_6 = arith.constant 1 : index
    %c0_7 = arith.constant 0 : index
    %10 = vector.load %arg2[%c1_6, %c0_7] : memref<2x256xf32, #tpu.memory_space<vmem>>, vector<1x256xf32>
    %11 = vector.broadcast %9 : vector<8x1xf32> to vector<8x256xf32>
    %12 = vector.broadcast %10 : vector<1x256xf32> to vector<8x256xf32>
    %13 = arith.mulf %11, %12 : vector<8x256xf32>
    %14 = arith.addf %8, %13 : vector<8x256xf32>
    %cst = arith.constant 0.000000e+00 : f32
    %15 = vector.broadcast %cst : f32 to vector<8x256xf32>
    %16 = arith.maximumf %14, %15 : vector<8x256xf32>
    %17 = arith.truncf %16 : vector<8x256xf32> to vector<8x256xbf16>
    %c0_8 = arith.constant 0 : index
    %c0_9 = arith.constant 0 : index
    %18 = vector.load %arg4[%c0_8, %c0_9] : memref<256x8xbf16, #tpu.memory_space<vmem>>, vector<256x8xbf16>
    %cst_10 = arith.constant dense<0.000000e+00> : vector<8x8xf32>
    %19 = tpu.matmul %17, %18, %cst_10 {dimension_numbers = #tpu.dot_dimension_numbers<[1], [0], [0], [1], [0, 0, 1, 1], [], []>} : vector<8x256xbf16>, vector<256x8xbf16>, vector<8x8xf32> -> vector<8x8xf32>
    %c0_11 = arith.constant 0 : index
    %c0_12 = arith.constant 0 : index
    %20 = vector.load %arg5[%c0_11, %c0_12] : memref<1x8xf32, #tpu.memory_space<vmem>>, vector<1x8xf32>
    %21 = vector.broadcast %20 : vector<1x8xf32> to vector<8x8xf32>
    %22 = arith.addf %19, %21 : vector<8x8xf32>
    %c0_13 = arith.constant 0 : index
    %c0_14 = arith.constant 0 : index
    %23 = vector.load %arg6[%c0_13, %c0_14] : memref<8x8xf32, #tpu.memory_space<vmem>>, vector<8x8xf32>
    tpu.vector_store %arg6[%c0_13, %c0_14], %22 {strides = array<i32>} : memref<8x8xf32, #tpu.memory_space<vmem>>, vector<8x8xf32>,
    return
  }
  func.func @transform_0(%arg0: i32) -> (i32, i32) {
    %c0_i32 = arith.constant 0 : i32
    %c0_i32_0 = arith.constant 0 : i32
    return %arg0, %c0_i32 : i32, i32
  }
  func.func @transform_1(%arg0: i32) -> (i32, i32) {
    %c0_i32 = arith.constant 0 : i32
    %c0_i32_0 = arith.constant 0 : i32
    %c0_i32_1 = arith.constant 0 : i32
    return %c0_i32, %c0_i32_0 : i32, i32
  }
  func.func @transform_2(%arg0: i32) -> (i32, i32) {
    %c0_i32 = arith.constant 0 : i32
    %c0_i32_0 = arith.constant 0 : i32
    %c0_i32_1 = arith.constant 0 : i32
    return %c0_i32, %c0_i32_0 : i32, i32
  }
  func.func @transform_3(%arg0: i32) -> (i32, i32) {
    %c0_i32 = arith.constant 0 : i32
    %c0_i32_0 = arith.constant 0 : i32
    %c0_i32_1 = arith.constant 0 : i32
    return %c0_i32, %c0_i32_0 : i32, i32
  }
  func.func @transform_4(%arg0: i32) -> (i32, i32) {
    %c0_i32 = arith.constant 0 : i32
    %c0_i32_0 = arith.constant 0 : i32
    %c0_i32_1 = arith.constant 0 : i32
    return %c0_i32, %c0_i32_0 : i32, i32
  }
  func.func @transform_5(%arg0: i32) -> (i32, i32) {
    %c0_i32 = arith.constant 0 : i32
    %c0_i32_0 = arith.constant 0 : i32
    return %arg0, %c0_i32 : i32, i32
  }
}

</mosaic_0001>

<llo_original>
// kernel: tpu_custom_call.1
$region0: #{tpu_custom_call.1}
  #allocation0 [shape = 'u32[]', space=smem, size = 0x4, offset = 0x4, fixed_abs, tag = 'smem constant byte address 0x4 - core index']
  #allocation1 [shape = 'u32[144,128]{1,0:T(1,128)}', space=vmem, size = 0x12000, scoped, tag = 'internal scratch']
  %s0 = inlined_call_operand.vmem [shape: f32[8,2], index: 0, kind: input, shape index: {}]
  %s1 = inlined_call_operand.vmem [shape: f32[2,256], index: 1, kind: input, shape index: {}]
  %s2 = inlined_call_operand.vmem [shape: f32[1,256], index: 2, kind: input, shape index: {}]
  %s3 = inlined_call_operand.vmem [shape: bf16[256,8], index: 3, kind: input, shape index: {}]
  %s4 = inlined_call_operand.vmem [shape: f32[1,8], index: 4, kind: input, shape index: {}]
  %s5 = inlined_call_operand.hbm [shape: f32[8,8], index: 5, kind: output, shape index: {}]
  %s6 = sld [smem:[#allocation0]]
  $region30: #{tpu_custom_call.1} parent=0
    _
  %s8 = ssub.s32 1, %s6
  %s9 = scalar_select 0, %s8, %s6
  $region1: #{tpu_custom_call.1} parent=0
    #allocation2 [shape = 'u8[4096]{0}', space=vmem, size = 0x1000, scoped, tag = 'output window, operand 0, single buffered']
    #allocation3 [shape = 's32[1]{0}', space=sflag, size = 0x4, scoped, tag = 'scoped memory for tpu_custom_call.1']
    %10 = vsyncpa [#allocation3], 0
    // Predicated region
    $region2: #{tpu_custom_call.1} parent=1 // pred_check
      _
    $region3: #{tpu_custom_call.1} parent=1 // pred_check_branch
      %12 = sbr.rel (0) target = $region5
    $region4: #{tpu_custom_call.1} parent=1 // pred_region
      _
    $region5: #{tpu_custom_call.1} parent=1 // pred_fallthru
      _
    // Predicated region
    $region6: #{tpu_custom_call.1} parent=1 // pred_check
      _
    $region7: #{tpu_custom_call.1} parent=1 // pred_check_branch
      %14 = sbr.rel (0) target = $region9
    $region8: #{tpu_custom_call.1} parent=1 // pred_region
      _
    $region9: #{tpu_custom_call.1} parent=1 // pred_fallthru
      _
    // Predicated region
    $region10: #{tpu_custom_call.1} parent=1 // pred_check
      _
    $region11: #{tpu_custom_call.1} parent=1 // pred_check_branch
      %16 = sbr.rel (0) target = $region13
    $region12: #{tpu_custom_call.1} parent=1 // pred_region
      _
    $region13: #{tpu_custom_call.1} parent=1 // pred_fallthru
      _
    // Predicated region
    $region14: #{tpu_custom_call.1} parent=1 // pred_check
      _
    $region15: #{tpu_custom_call.1} parent=1 // pred_check_branch
      %18 = sbr.rel (0) target = $region17
    $region16: #{tpu_custom_call.1} parent=1 // pred_region
      _
    $region17: #{tpu_custom_call.1} parent=1 // pred_fallthru
      _
    // Predicated region
    $region18: #{tpu_custom_call.1} parent=1 // pred_check
      _
    $region19: #{tpu_custom_call.1} parent=1 // pred_check_branch
      %20 = sbr.rel (0) target = $region21
    $region20: #{tpu_custom_call.1} parent=1 // pred_region
      _
    $region21: #{tpu_custom_call.1} parent=1 // pred_fallthru
      _
    %v22 = vld [vmem:[%s2] sm:$0x3]
    %v24 = vlaneseq
    %v25 = vshrl.u32 %v24, 7
    %v26 = vsub.s32 0, %v25
    %v27 = vrot.slane %v22, %v26
    %v28 = vlaneseq
    %v29 = vshrl.u32 %v28, 7
    %v30 = vsub.s32 1, %v29
    %v31 = vrot.slane %v22, %v30
    %v34 = vld [vmem:[%s0] sm:$0xff]
    %v35 = vld [vmem:[%s1] ss:$2 sm:$0x3]
    %37 = vset.pattern.permute.xlu0 0
    %38 = vperm.xlu0 %37, %v34
    %v39 = vpop.permute.xlu0 %38
    %v42 = vlaneseq
    %v43 = vshrl.u32 %v42, 7
    %v44 = vsub.s32 0, %v43
    %v45 = vrot.slane %v35, %v44
    %v46 = vlaneseq
    %v47 = vshrl.u32 %v46, 7
    %v48 = vsub.s32 1, %v47
    %v49 = vrot.slane %v35, %v48
    %v52 = vmul.f32 %v39, %v45
    %v53 = vmul.f32 %v39, %v49
    %v54 = vadd.f32 %v27, %v52
    %v55 = vadd.f32 %v31, %v53
    %s56 = scalar_lea.vmem %s1, 1
    %v57 = vld [vmem:[%s56] ss:$2 sm:$0x3]
    %58 = vset.pattern.permute.xlu0 1
    %59 = vperm.xlu0 %58, %v34
    %v60 = vpop.permute.xlu0 %59
    %v63 = vlaneseq
    %v64 = vshrl.u32 %v63, 7
    %v65 = vsub.s32 0, %v64
    %v66 = vrot.slane %v57, %v65
    %v67 = vlaneseq
    %v68 = vshrl.u32 %v67, 7
    %v69 = vsub.s32 1, %v68
    %v70 = vrot.slane %v57, %v69
    %v73 = vmul.f32 %v60, %v66
    %v74 = vmul.f32 %v60, %v70
    %v75 = vadd.f32 %v54, %v73
    %v76 = vadd.f32 %v55, %v74
    %v77 = vmax.f32 %v75, 0.0
    %v78 = vmax.f32 %v76, 0.0
    %v79 = vpack.c.bf16 %v77, %v77
    %v80 = vpack.c.bf16 %v78, %v78
    %v81 = vld [vmem:[%s3] sm:$0xf]
    %v82 = vld [vmem:[%s3 + $0x4] sm:$0xf]
    %v83 = vld [vmem:[%s3 + $0x8] sm:$0xf]
    %v84 = vld [vmem:[%s3 + $0xc] sm:$0xf]
    %v85 = vld [vmem:[%s3 + $0x10] sm:$0xf]
    %v86 = vld [vmem:[%s3 + $0x14] sm:$0xf]
    %v87 = vld [vmem:[%s3 + $0x18] sm:$0xf]
    %v88 = vld [vmem:[%s3 + $0x1c] sm:$0xf]
    %v89 = vld [vmem:[%s3 + $0x20] sm:$0xf]
    %v90 = vld [vmem:[%s3 + $0x24] sm:$0xf]
    %v91 = vld [vmem:[%s3 + $0x28] sm:$0xf]
    %v92 = vld [vmem:[%s3 + $0x2c] sm:$0xf]
    %v93 = vld [vmem:[%s3 + $0x30] sm:$0xf]
    %v94 = vld [vmem:[%s3 + $0x34] sm:$0xf]
    %v95 = vld [vmem:[%s3 + $0x38] sm:$0xf]
    %v96 = vld [vmem:[%s3 + $0x3c] sm:$0xf]
    %v97 = vld [vmem:[%s3 + $0x40] sm:$0xf]
    %v98 = vld [vmem:[%s3 + $0x44] sm:$0xf]
    %v99 = vld [vmem:[%s3 + $0x48] sm:$0xf]
    %v100 = vld [vmem:[%s3 + $0x4c] sm:$0xf]
    %v101 = vld [vmem:[%s3 + $0x50] sm:$0xf]
    %v102 = vld [vmem:[%s3 + $0x54] sm:$0xf]
    %v103 = vld [vmem:[%s3 + $0x58] sm:$0xf]
    %v104 = vld [vmem:[%s3 + $0x5c] sm:$0xf]
    %v105 = vld [vmem:[%s3 + $0x60] sm:$0xf]
    %v106 = vld [vmem:[%s3 + $0x64] sm:$0xf]
    %v107 = vld [vmem:[%s3 + $0x68] sm:$0xf]
    %v108 = vld [vmem:[%s3 + $0x6c] sm:$0xf]
    %v109 = vld [vmem:[%s3 + $0x70] sm:$0xf]
    %v110 = vld [vmem:[%s3 + $0x74] sm:$0xf]
    %v111 = vld [vmem:[%s3 + $0x78] sm:$0xf]
    %v112 = vld [vmem:[%s3 + $0x7c] sm:$0xf]
    %v113 = vld [vmem:[%s4] sm:$0x1]
    %v115 = vlaneseq
    %v116 = vshrl.u32 %v115, 7
    %v117 = vsub.s32 0, %v116
    %v118 = vrot.slane %v113, %v117
    %v152 = vunpack.c.l.b16 %v81
    %v153 = vunpack.c.l.b16 %v82
    %v154 = vunpack.c.l.b16 %v83
    %v155 = vunpack.c.l.b16 %v84
    %v156 = vunpack.c.l.b16 %v85
    %v157 = vunpack.c.l.b16 %v86
    %v158 = vunpack.c.l.b16 %v87
    %v159 = vunpack.c.l.b16 %v88
    %v160 = vunpack.c.l.b16 %v89
    %v161 = vunpack.c.l.b16 %v90
    %v162 = vunpack.c.l.b16 %v91
    %v163 = vunpack.c.l.b16 %v92
    %v164 = vunpack.c.l.b16 %v93
    %v165 = vunpack.c.l.b16 %v94
    %v166 = vunpack.c.l.b16 %v95
    %v167 = vunpack.c.l.b16 %v96
    %v168 = vunpack.c.l.b16 %v97
    %v169 = vunpack.c.l.b16 %v98
    %v170 = vunpack.c.l.b16 %v99
    %v171 = vunpack.c.l.b16 %v100
    %v172 = vunpack.c.l.b16 %v101
    %v173 = vunpack.c.l.b16 %v102
    %v174 = vunpack.c.l.b16 %v103
    %v175 = vunpack.c.l.b16 %v104
    %v176 = vunpack.c.l.b16 %v105
    %v177 = vunpack.c.l.b16 %v106
    %v178 = vunpack.c.l.b16 %v107
    %v179 = vunpack.c.l.b16 %v108
    %v180 = vunpack.c.l.b16 %v109
    %v181 = vunpack.c.l.b16 %v110
    %v182 = vunpack.c.l.b16 %v111
    %v183 = vunpack.c.l.b16 %v112
    %v184 = vpack.c.b16 %v153, %v152
    %v185 = vpack.c.b16 %v155, %v154
    %v186 = vpack.c.b16 %v157, %v156
    %v187 = vpack.c.b16 %v159, %v158
    %v188 = vpack.c.b16 %v161, %v160
    %v189 = vpack.c.b16 %v163, %v162
    %v190 = vpack.c.b16 %v165, %v164
    %v191 = vpack.c.b16 %v167, %v166
    %v192 = vpack.c.b16 %v169, %v168
    %v193 = vpack.c.b16 %v171, %v170
    %v194 = vpack.c.b16 %v173, %v172
    %v195 = vpack.c.b16 %v175, %v174
    %v196 = vpack.c.b16 %v177, %v176
    %v197 = vpack.c.b16 %v179, %v178
    %v198 = vpack.c.b16 %v181, %v180
    %v199 = vpack.c.b16 %v183, %v182
    %216 = vmatprep.subr.bf16.mxu0 0
    %217 = vmatpush1.bf16.msra.mxu0 %v184
    %218 = vmatprep.subr.bf16.mxu0 0
    %219 = vmatpush1.bf16.msra.mxu0 %v185
    %220 = vmatprep.subr.bf16.mxu0 0
    %221 = vmatpush1.bf16.msra.mxu0 %v186
    %222 = vmatprep.subr.bf16.mxu0 0
    %223 = vmatpush1.bf16.msra.mxu0 %v187
    %224 = vmatprep.subr.bf16.mxu0 0
    %225 = vmatpush1.bf16.msra.mxu0 %v188
    %226 = vmatprep.subr.bf16.mxu0 0
    %227 = vmatpush1.bf16.msra.mxu0 %v189
    %228 = vmatprep.subr.bf16.mxu0 0
    %229 = vmatpush1.bf16.msra.mxu0 %v190
    %230 = vmatprep.subr.bf16.mxu0 0
    %231 = vmatpush1.bf16.msra.mxu0 %v191
    %232 = vmatprep.subr.bf16.mxu0 0
    %233 = vmatpush1.bf16.msra.mxu0 %v192
    %234 = vmatprep.subr.bf16.mxu0 0
    %235 = vmatpush1.bf16.msra.mxu0 %v193
    %236 = vmatprep.subr.bf16.mxu0 0
    %237 = vmatpush1.bf16.msra.mxu0 %v194
    %238 = vmatprep.subr.bf16.mxu0 0
    %239 = vmatpush1.bf16.msra.mxu0 %v195
    %240 = vmatprep.subr.bf16.mxu0 0
    %241 = vmatpush1.bf16.msra.mxu0 %v196
    %242 = vmatprep.subr.bf16.mxu0 0
    %243 = vmatpush1.bf16.msra.mxu0 %v197
    %244 = vmatprep.subr.bf16.mxu0 0
    %245 = vmatpush1.bf16.msra.mxu0 %v198
    %246 = vmatprep.subr.bf16.mxu0 0
    %247 = vmatpush1.bf16.msra.mxu0 %v199
    %248 = vmatprep.mubr.bf16.mxu0 %v80
    %249 = vmatmul.mubr.bf16.gmra.mrb[0].mxu0 %v79
    %v250 = vpop.f32.mrb[0].mxu0
    %v251 = vadd.f32 %v118, %v250
    %v252 = vpop.f32.mrb[0].mxu0
    %v253 = vpop.f32.mrb[0].mxu0
    %v254 = vpop.f32.mrb[0].mxu0
    %255 = vdwg.mxu0
    %vm256 = vcmask 64512
    %257 = vst.msk [vmem:[#allocation2] sm:$0xff] %vm256, %v251
    // Predicated region
    $region22: #{tpu_custom_call.1} parent=1 // pred_check
      _
    $region23: #{tpu_custom_call.1} parent=1 // pred_check_branch
      %259 = sbr.rel (0) target = $region25
    $region24: #{tpu_custom_call.1} parent=1 // pred_region
      %s261 = ssub.s32 128, 128
      %262 = vsyncadd [#allocation3], %s261
      %s264 = sshll.u32 [#allocation2], 4
      %s265 = int_to_ptr.vmem [resolvable:$true] %s264
      %267 = dma.vmem_to_hbm [thread:$0]  %s265, 128, %s5, [#allocation3]
    $region25: #{tpu_custom_call.1} parent=1 // pred_fallthru
      _
    // Predicated region
    $region26: #{tpu_custom_call.1} parent=1 // pred_check
      _
    $region27: #{tpu_custom_call.1} parent=1 // pred_check_branch
      %269 = sbr.rel (0) target = $region29
    $region28: #{tpu_custom_call.1} parent=1 // pred_region
      %270 = dma.done [#allocation3], 128
    $region29: #{tpu_custom_call.1} parent=1 // pred_fallthru
      _
    %271 = vsyncpa [#allocation3], 1

// kernel: tpu_custom_call.1
$region0: #{tpu_custom_call.1}
  #allocation0 [shape = 'u32[]', space=smem, size = 0x4, offset = 0x4, fixed_abs, tag = 'smem constant byte address 0x4 - core index']
  #allocation1 [shape = 'u32[144,128]{1,0:T(1,128)}', space=vmem, size = 0x12000, scoped, tag = 'internal scratch']
  %s0 = inlined_call_operand.vmem [shape: f32[8,2], index: 0, kind: input, shape index: {}]
  %s1 = inlined_call_operand.vmem [shape: f32[2,256], index: 1, kind: input, shape index: {}]
  %s2 = inlined_call_operand.vmem [shape: f32[1,256], index: 2, kind: input, shape index: {}]
  %s3 = inlined_call_operand.vmem [shape: bf16[256,8], index: 3, kind: input, shape index: {}]
  %s4 = inlined_call_operand.vmem [shape: f32[1,8], index: 4, kind: input, shape index: {}]
  %s5 = inlined_call_operand.hbm [shape: f32[8,8], index: 5, kind: output, shape index: {}]
  %s6 = sld [smem:[#allocation0]]
  $region30: #{tpu_custom_call.1} parent=0
    _
  %s8 = ssub.s32 1, %s6
  %s9 = scalar_select 0, %s8, %s6
  $region1: #{tpu_custom_call.1} parent=0
    #allocation2 [shape = 'u8[4096]{0}', space=vmem, size = 0x1000, scoped, tag = 'output window, operand 0, single buffered']
    #allocation3 [shape = 's32[1]{0}', space=sflag, size = 0x4, scoped, tag = 'scoped memory for tpu_custom_call.1']
    %10 = vsyncpa [#allocation3], 0
    // Predicated region
    $region2: #{tpu_custom_call.1} parent=1 // pred_check
      _
    $region3: #{tpu_custom_call.1} parent=1 // pred_check_branch
      %12 = sbr.rel (0) target = $region5
    $region4: #{tpu_custom_call.1} parent=1 // pred_region
      _
    $region5: #{tpu_custom_call.1} parent=1 // pred_fallthru
      _
    // Predicated region
    $region6: #{tpu_custom_call.1} parent=1 // pred_check
      _
    $region7: #{tpu_custom_call.1} parent=1 // pred_check_branch
      %14 = sbr.rel (0) target = $region9
    $region8: #{tpu_custom_call.1} parent=1 // pred_region
      _
    $region9: #{tpu_custom_call.1} parent=1 // pred_fallthru
      _
    // Predicated region
    $region10: #{tpu_custom_call.1} parent=1 // pred_check
      _
    $region11: #{tpu_custom_call.1} parent=1 // pred_check_branch
      %16 = sbr.rel (0) target = $region13
    $region12: #{tpu_custom_call.1} parent=1 // pred_region
      _
    $region13: #{tpu_custom_call.1} parent=1 // pred_fallthru
      _
    // Predicated region
    $region14: #{tpu_custom_call.1} parent=1 // pred_check
      _
    $region15: #{tpu_custom_call.1} parent=1 // pred_check_branch
      %18 = sbr.rel (0) target = $region17
    $region16: #{tpu_custom_call.1} parent=1 // pred_region
      _
    $region17: #{tpu_custom_call.1} parent=1 // pred_fallthru
      _
    // Predicated region
    $region18: #{tpu_custom_call.1} parent=1 // pred_check
      _
    $region19: #{tpu_custom_call.1} parent=1 // pred_check_branch
      %20 = sbr.rel (0) target = $region21
    $region20: #{tpu_custom_call.1} parent=1 // pred_region
      _
    $region21: #{tpu_custom_call.1} parent=1 // pred_fallthru
      _
    %v22 = vld [vmem:[%s2] sm:$0x3]
    %v24 = vlaneseq
    %v25 = vshrl.u32 %v24, 7
    %v26 = vsub.s32 0, %v25
    %v27 = vrot.slane %v22, %v26
    %v28 = vlaneseq
    %v29 = vshrl.u32 %v28, 7
    %v30 = vsub.s32 1, %v29
    %v31 = vrot.slane %v22, %v30
    %v34 = vld [vmem:[%s0] sm:$0xff]
    %v35 = vld [vmem:[%s1] ss:$2 sm:$0x3]
    %37 = vset.pattern.permute.xlu0 0
    %38 = vperm.xlu0 %37, %v34
    %v39 = vpop.permute.xlu0 %38
    %v42 = vlaneseq
    %v43 = vshrl.u32 %v42, 7
    %v44 = vsub.s32 0, %v43
    %v45 = vrot.slane %v35, %v44
    %v46 = vlaneseq
    %v47 = vshrl.u32 %v46, 7
    %v48 = vsub.s32 1, %v47
    %v49 = vrot.slane %v35, %v48
    %v52 = vmul.f32 %v39, %v45
    %v53 = vmul.f32 %v39, %v49
    %v54 = vadd.f32 %v27, %v52
    %v55 = vadd.f32 %v31, %v53
    %s56 = scalar_lea.vmem %s1, 1
    %v57 = vld [vmem:[%s56] ss:$2 sm:$0x3]
    %58 = vset.pattern.permute.xlu0 1
    %59 = vperm.xlu0 %58, %v34
    %v60 = vpop.permute.xlu0 %59
    %v63 = vlaneseq
    %v64 = vshrl.u32 %v63, 7
    %v65 = vsub.s32 0, %v64
    %v66 = vrot.slane %v57, %v65
    %v67 = vlaneseq
    %v68 = vshrl.u32 %v67, 7
    %v69 = vsub.s32 1, %v68
    %v70 = vrot.slane %v57, %v69
    %v73 = vmul.f32 %v60, %v66
    %v74 = vmul.f32 %v60, %v70
    %v75 = vadd.f32 %v54, %v73
    %v76 = vadd.f32 %v55, %v74
    %v77 = vmax.f32 %v75, 0.0
    %v78 = vmax.f32 %v76, 0.0
    %v79 = vpack.c.bf16 %v77, %v77
    %v80 = vpack.c.bf16 %v78, %v78
    %v81 = vld [vmem:[%s3] sm:$0xf]
    %v82 = vld [vmem:[%s3 + $0x4] sm:$0xf]
    %v83 = vld [vmem:[%s3 + $0x8] sm:$0xf]
    %v84 = vld [vmem:[%s3 + $0xc] sm:$0xf]
    %v85 = vld [vmem:[%s3 + $0x10] sm:$0xf]
    %v86 = vld [vmem:[%s3 + $0x14] sm:$0xf]
    %v87 = vld [vmem:[%s3 + $0x18] sm:$0xf]
    %v88 = vld [vmem:[%s3 + $0x1c] sm:$0xf]
    %v89 = vld [vmem:[%s3 + $0x20] sm:$0xf]
    %v90 = vld [vmem:[%s3 + $0x24] sm:$0xf]
    %v91 = vld [vmem:[%s3 + $0x28] sm:$0xf]
    %v92 = vld [vmem:[%s3 + $0x2c] sm:$0xf]
    %v93 = vld [vmem:[%s3 + $0x30] sm:$0xf]
    %v94 = vld [vmem:[%s3 + $0x34] sm:$0xf]
    %v95 = vld [vmem:[%s3 + $0x38] sm:$0xf]
    %v96 = vld [vmem:[%s3 + $0x3c] sm:$0xf]
    %v97 = vld [vmem:[%s3 + $0x40] sm:$0xf]
    %v98 = vld [vmem:[%s3 + $0x44] sm:$0xf]
    %v99 = vld [vmem:[%s3 + $0x48] sm:$0xf]
    %v100 = vld [vmem:[%s3 + $0x4c] sm:$0xf]
    %v101 = vld [vmem:[%s3 + $0x50] sm:$0xf]
    %v102 = vld [vmem:[%s3 + $0x54] sm:$0xf]
    %v103 = vld [vmem:[%s3 + $0x58] sm:$0xf]
    %v104 = vld [vmem:[%s3 + $0x5c] sm:$0xf]
    %v105 = vld [vmem:[%s3 + $0x60] sm:$0xf]
    %v106 = vld [vmem:[%s3 + $0x64] sm:$0xf]
    %v107 = vld [vmem:[%s3 + $0x68] sm:$0xf]
    %v108 = vld [vmem:[%s3 + $0x6c] sm:$0xf]
    %v109 = vld [vmem:[%s3 + $0x70] sm:$0xf]
    %v110 = vld [vmem:[%s3 + $0x74] sm:$0xf]
    %v111 = vld [vmem:[%s3 + $0x78] sm:$0xf]
    %v112 = vld [vmem:[%s3 + $0x7c] sm:$0xf]
    %v113 = vld [vmem:[%s4] sm:$0x1]
    %v115 = vlaneseq
    %v116 = vshrl.u32 %v115, 7
    %v117 = vsub.s32 0, %v116
    %v118 = vrot.slane %v113, %v117
    %v152 = vunpack.c.l.b16 %v81
    %v153 = vunpack.c.l.b16 %v82
    %v154 = vunpack.c.l.b16 %v83
    %v155 = vunpack.c.l.b16 %v84
    %v156 = vunpack.c.l.b16 %v85
    %v157 = vunpack.c.l.b16 %v86
    %v158 = vunpack.c.l.b16 %v87
    %v159 = vunpack.c.l.b16 %v88
    %v160 = vunpack.c.l.b16 %v89
    %v161 = vunpack.c.l.b16 %v90
    %v162 = vunpack.c.l.b16 %v91
    %v163 = vunpack.c.l.b16 %v92
    %v164 = vunpack.c.l.b16 %v93
    %v165 = vunpack.c.l.b16 %v94
    %v166 = vunpack.c.l.b16 %v95
    %v167 = vunpack.c.l.b16 %v96
    %v168 = vunpack.c.l.b16 %v97
    %v169 = vunpack.c.l.b16 %v98
    %v170 = vunpack.c.l.b16 %v99
    %v171 = vunpack.c.l.b16 %v100
    %v172 = vunpack.c.l.b16 %v101
    %v173 = vunpack.c.l.b16 %v102
    %v174 = vunpack.c.l.b16 %v103
    %v175 = vunpack.c.l.b16 %v104
    %v176 = vunpack.c.l.b16 %v105
    %v177 = vunpack.c.l.b16 %v106
    %v178 = vunpack.c.l.b16 %v107
    %v179 = vunpack.c.l.b16 %v108
    %v180 = vunpack.c.l.b16 %v109
    %v181 = vunpack.c.l.b16 %v110
    %v182 = vunpack.c.l.b16 %v111
    %v183 = vunpack.c.l.b16 %v112
    %v184 = vpack.c.b16 %v153, %v152
    %v185 = vpack.c.b16 %v155, %v154
    %v186 = vpack.c.b16 %v157, %v156
    %v187 = vpack.c.b16 %v159, %v158
    %v188 = vpack.c.b16 %v161, %v160
    %v189 = vpack.c.b16 %v163, %v162
    %v190 = vpack.c.b16 %v165, %v164
    %v191 = vpack.c.b16 %v167, %v166
    %v192 = vpack.c.b16 %v169, %v168
    %v193 = vpack.c.b16 %v171, %v170
    %v194 = vpack.c.b16 %v173, %v172
    %v195 = vpack.c.b16 %v175, %v174
    %v196 = vpack.c.b16 %v177, %v176
    %v197 = vpack.c.b16 %v179, %v178
    %v198 = vpack.c.b16 %v181, %v180
    %v199 = vpack.c.b16 %v183, %v182
    %216 = vmatprep.subr.bf16.mxu0 0
    %217 = vmatpush1.bf16.msra.mxu0 %v184
    %218 = vmatprep.subr.bf16.mxu0 0
    %219 = vmatpush1.bf16.msra.mxu0 %v185
    %220 = vmatprep.subr.bf16.mxu0 0
    %221 = vmatpush1.bf16.msra.mxu0 %v186
    %222 = vmatprep.subr.bf16.mxu0 0
    %223 = vmatpush1.bf16.msra.mxu0 %v187
    %224 = vmatprep.subr.bf16.mxu0 0
    %225 = vmatpush1.bf16.msra.mxu0 %v188
    %226 = vmatprep.subr.bf16.mxu0 0
    %227 = vmatpush1.bf16.msra.mxu0 %v189
    %228 = vmatprep.subr.bf16.mxu0 0
    %229 = vmatpush1.bf16.msra.mxu0 %v190
    %230 = vmatprep.subr.bf16.mxu0 0
    %231 = vmatpush1.bf16.msra.mxu0 %v191
    %232 = vmatprep.subr.bf16.mxu0 0
    %233 = vmatpush1.bf16.msra.mxu0 %v192
    %234 = vmatprep.subr.bf16.mxu0 0
    %235 = vmatpush1.bf16.msra.mxu0 %v193
    %236 = vmatprep.subr.bf16.mxu0 0
    %237 = vmatpush1.bf16.msra.mxu0 %v194
    %238 = vmatprep.subr.bf16.mxu0 0
    %239 = vmatpush1.bf16.msra.mxu0 %v195
    %240 = vmatprep.subr.bf16.mxu0 0
    %241 = vmatpush1.bf16.msra.mxu0 %v196
    %242 = vmatprep.subr.bf16.mxu0 0
    %243 = vmatpush1.bf16.msra.mxu0 %v197
    %244 = vmatprep.subr.bf16.mxu0 0
    %245 = vmatpush1.bf16.msra.mxu0 %v198
    %246 = vmatprep.subr.bf16.mxu0 0
    %247 = vmatpush1.bf16.msra.mxu0 %v199
    %248 = vmatprep.mubr.bf16.mxu0 %v80
    %249 = vmatmul.mubr.bf16.gmra.mrb[0].mxu0 %v79
    %v250 = vpop.f32.mrb[0].mxu0
    %v251 = vadd.f32 %v118, %v250
    %v252 = vpop.f32.mrb[0].mxu0
    %v253 = vpop.f32.mrb[0].mxu0
    %v254 = vpop.f32.mrb[0].mxu0
    %255 = vdwg.mxu0
    %vm256 = vcmask 64512
    %257 = vst.msk [vmem:[#allocation2] sm:$0xff] %vm256, %v251
    // Predicated region
    $region22: #{tpu_custom_call.1} parent=1 // pred_check
      _
    $region23: #{tpu_custom_call.1} parent=1 // pred_check_branch
      %259 = sbr.rel (0) target = $region25
    $region24: #{tpu_custom_call.1} parent=1 // pred_region
      %s261 = ssub.s32 128, 128
      %262 = vsyncadd [#allocation3], %s261
      %s264 = sshll.u32 [#allocation2], 4
      %s265 = int_to_ptr.vmem [resolvable:$true] %s264
      %267 = dma.vmem_to_hbm [thread:$0]  %s265, 128, %s5, [#allocation3]
    $region25: #{tpu_custom_call.1} parent=1 // pred_fallthru
      _
    // Predicated region
    $region26: #{tpu_custom_call.1} parent=1 // pred_check
      _
    $region27: #{tpu_custom_call.1} parent=1 // pred_check_branch
      %269 = sbr.rel (0) target = $region29
    $region28: #{tpu_custom_call.1} parent=1 // pred_region
      %270 = dma.done [#allocation3], 128
    $region29: #{tpu_custom_call.1} parent=1 // pred_fallthru
      _
    %271 = vsyncpa [#allocation3], 1

</llo_original>
